<compile_context>
chip_gen: v6e
topology: v6e:2x2x1
jax: 0.10.0
libtpu: 0.0.40
codegen_flags: <defaults>
</compile_context>

<pallas_src>
import jax
import jax.numpy as jnp
from jax import lax
from jax.experimental import pallas as pl
from jax.experimental.pallas import tpu as pltpu

_LANES = 128
_SUBLANES = 8
_W_RESIDENT_BYTES = 16 << 20   # keep the full weight VMEM-resident below this size


# ------------------------------------------------------------------------ kernel
def attn_kernel(x_ref, w_ref, o_ref):
    # x_ref: (TS, n_in)  f32 VMEM -- tile of embeds
    # w_ref: (n_in, TN)  f32 VMEM -- ext1.weight, pre-transposed (K, N) layout
    # o_ref: (TS, TN)    f32 VMEM
    x = x_ref[...]
    # Numerically stable softmax over the feature (last) dim; exact divide keeps
    # the result within f32 rounding of the reference.
    m = jnp.max(x, axis=-1, keepdims=True)
    e = jnp.exp(x - m)
    weights_norm = e / jnp.sum(e, axis=-1, keepdims=True)
    attn_probs = weights_norm * x
    # Canonical MK x KN contraction on the MXU (no weight transpose in the body).
    o_ref[...] = lax.dot_general(
        attn_probs,
        w_ref[...],
        dimension_numbers=(((1,), (0,)), ((), ())),
        preferred_element_type=jnp.float32,
    ).astype(o_ref.dtype)


# ---------------------------------------------------------------- parameter prep
def prepare_ext1_weight(ext1_weight):
    """One-time parameter prep (outside the hot / per-call path).

    Transposes the PyTorch-layout (n_out, n_in) weight to (n_in, n_out) so the
    kernel runs a plain MKxKN matmul, and lane-pads n_out only when n_out >= 128
    (for tiny n_out a masked store beats a pad + extra HBM slice pass).
    Returns (prepared_weight, n_out).
    """
    n_out, n_in = ext1_weight.shape
    w_t = jnp.asarray(ext1_weight, jnp.float32).T            # (n_in, n_out)
    if n_out >= _LANES and n_out % _LANES != 0:
        n_out_p = pl.cdiv(n_out, _LANES) * _LANES
        w_t = jnp.zeros((n_in, n_out_p), jnp.float32).at[:, :n_out].set(w_t)
    return w_t, n_out


# ---------------------------------------------------------------- tiling helpers
def _vmem_capacity_bytes() -> int:
    try:
        cap = int(pltpu.get_tpu_info().vmem_capacity_bytes)
        if cap > 0:
            return cap
    except Exception:
        pass
    return 64 << 20   # conservative fallback: v7x per-TensorCore VMEM


def _tile_vmem_bytes(ts, n_in, tn, w_resident):
    w_bufs = 1 if w_resident else 2          # Buffered(1) when the weight is resident
    return (2 * ts * n_in * 4                # double-buffered embeds tile
            + 2 * ts * tn * 4                # double-buffered output tile
            + w_bufs * n_in * tn * 4         # weight block(s)
            + 3 * ts * n_in * 4)             # softmax temporaries (e / weights_norm / probs)


def _choose_out_tile(n_in, n_out_p):
    """Tile n_out only when the full weight is too big to keep VMEM-resident."""
    if n_out_p <= _LANES or n_in * n_out_p * 4 <= _W_RESIDENT_BYTES:
        return n_out_p
    tn = max(_LANES, (_W_RESIDENT_BYTES // (n_in * 4)) // _LANES * _LANES)
    return min(n_out_p, tn)


def _choose_seq_tile(S, n_in, tn, w_resident, budget):
    ts = min(S, _SUBLANES)
    for cand in (2048, 1024, 512, 256, 128, 64, 32, 16, 8):
        if cand <= S and _tile_vmem_bytes(cand, n_in, tn, w_resident) <= budget:
            ts = cand
            break
    # v7x has 2 TensorCores: give the "parallel" seq axis >= 2 steps when S allows,
    # so both cores get work even if everything fits in one tile.
    if pl.cdiv(S, ts) < 2 and S >= 2 * _SUBLANES:
        ts = pl.cdiv(pl.cdiv(S, 2), _SUBLANES) * _SUBLANES
    return ts


# ---------------------------------------------------------------------- wrapper
def attn_forward(embeds: jax.Array, w_prepped: jax.Array, n_out: int) -> jax.Array:
    """embeds: (S, n_in) f32; w_prepped: (n_in, n_out_p) from prepare_ext1_weight."""
    S, n_in = embeds.shape
    n_in_w, n_out_p = w_prepped.shape
    assert n_in_w == n_in, "weight/embeds feature-dim mismatch"

    cap = _vmem_capacity_bytes()
    budget = int(cap * 0.6)

    tn = _choose_out_tile(n_in, n_out_p)
    w_resident = (tn == n_out_p)
    ts = _choose_seq_tile(S, n_in, tn, w_resident, budget)

    grid = (pl.cdiv(S, ts), pl.cdiv(n_out_p, tn))

    vmem_need = _tile_vmem_bytes(ts, n_in, tn, w_resident)
    vmem_limit = max(32 << 20, 2 * vmem_need)
    vmem_limit = int(min(vmem_limit, int(cap * 0.75)))
    vmem_limit = int(min(max(vmem_limit, vmem_need + (1 << 20)), cap))

    cost = pl.CostEstimate(
        flops=2 * S * n_in * n_out_p + 6 * S * n_in * grid[1],
        transcendentals=S * n_in * grid[1],
        bytes_accessed=4 * (S * n_in + n_in * n_out_p + S * n_out_p),
    )

    def _build(weight_spec):
        return pl.pallas_call(
            attn_kernel,
            out_shape=jax.ShapeDtypeStruct((S, n_out_p), jnp.float32),
            grid=grid,
            in_specs=[
                pl.BlockSpec((ts, n_in), lambda i, j: (i, 0)),   # embeds: streamed over S
                weight_spec,                                     # weight
            ],
            out_specs=pl.BlockSpec((ts, tn), lambda i, j: (i, j)),
            compiler_params=pltpu.CompilerParams(
                dimension_semantics=("parallel", "parallel"),
                vmem_limit_bytes=vmem_limit,
            ),
            cost_estimate=cost,
        )(embeds, w_prepped)

    plain_w_spec = pl.BlockSpec((n_in, tn), lambda i, j: (0, j))
    if w_resident:
        # Resident weight (constant block index): single-buffer it to free VMEM.
        try:
            out_p = _build(pl.BlockSpec((n_in, tn), lambda i, j: (0, j),
                                        pipeline_mode=pl.Buffered(1)))
        except Exception:
            # Older Pallas without pipeline_mode / Buffered(1): fall back gracefully.
            out_p = _build(plain_w_spec)
    else:
        out_p = _build(plain_w_spec)

    return out_p[:, :n_out] if n_out_p != n_out else out_p


def attn_reference(embeds, ext1_weight):
    sm = jax.nn.softmax(embeds, axis=-1)
    probs = sm * embeds
    return probs @ ext1_weight.T


if __name__ == "__main__":
    key = jax.random.PRNGKey(0)
    k_x, k_fc, k_ext = jax.random.split(key, 3)

    S, n_in, n_out = 8, 32, 16

    # PyTorch Linear default init: U(-1/sqrt(fan_in), +1/sqrt(fan_in))
    bound = 1.0 / jnp.sqrt(jnp.float32(n_in))
    fc_weight = jax.random.uniform(k_fc, (1, n_in), jnp.float32, -bound, bound)   # unused in forward
    ext1_weight = jax.random.uniform(k_ext, (n_out, n_in), jnp.float32, -bound, bound)

    embeds = jax.random.normal(k_x, (S, n_in), dtype=jnp.float32)

    # One-time weight prep (transpose / conditional pad) outside the hot path.
    w_prepped, n_out_real = prepare_ext1_weight(ext1_weight)

    out = attn_forward(embeds, w_prepped, n_out_real)
    out = jax.block_until_ready(out)

    ref = attn_reference(embeds, ext1_weight)
    assert out.shape == (S, n_out)
    assert jnp.allclose(out, ref, atol=1e-4, rtol=1e-4), "mismatch vs reference"

    print("KERNEL_OK")
</pallas_src>

<mosaic_0001>
module attributes {stable_mosaic.version = 11 : i64} {
  func.func @attn_kernel(%arg0: i32, %arg1: i32, %arg2: memref<8x32xf32, #tpu.memory_space<vmem>>, %arg3: memref<32x16xf32, #tpu.memory_space<vmem>>, %arg4: memref<8x16xf32, #tpu.memory_space<vmem>>) attributes {dimension_semantics = [#tpu.dimension_semantics<parallel>, #tpu.dimension_semantics<parallel>], iteration_bounds = array<i64: 1, 1>, scalar_prefetch = 0 : i64, scratch_operands = 0 : i64, tpu.core_type = #tpu.core_type<tc>, window_params = [{transform_indices = @transform_0, window_bounds = array<i64: 8, 32>}, {pipeline_mode = #tpu.pipeline_mode<synchronous>, transform_indices = @transform_1, window_bounds = array<i64: 32, 16>}, {transform_indices = @transform_2, window_bounds = array<i64: 8, 16>}]} {
    %c0 = arith.constant 0 : index
    %c0_0 = arith.constant 0 : index
    %0 = vector.load %arg2[%c0, %c0_0] : memref<8x32xf32, #tpu.memory_space<vmem>>, vector<8x32xf32>
    %cst = arith.constant dense<0xFF800000> : vector<8xf32>
    %1 = vector.multi_reduction <maximumf>, %0, %cst [1] : vector<8x32xf32> to vector<8xf32>
    %2 = vector.shape_cast %1 : vector<8xf32> to vector<8x1xf32>
    %3 = vector.broadcast %2 : vector<8x1xf32> to vector<8x32xf32>
    %4 = arith.subf %0, %3 : vector<8x32xf32>
    %5 = math.exp %4 : vector<8x32xf32>
    %cst_1 = arith.constant dense<0.000000e+00> : vector<8xf32>
    %6 = vector.multi_reduction <add>, %5, %cst_1 [1] : vector<8x32xf32> to vector<8xf32>
    %7 = vector.shape_cast %6 : vector<8xf32> to vector<8x1xf32>
    %8 = vector.broadcast %7 : vector<8x1xf32> to vector<8x32xf32>
    %9 = arith.divf %5, %8 : vector<8x32xf32>
    %10 = arith.mulf %9, %0 : vector<8x32xf32>
    %c0_2 = arith.constant 0 : index
    %c0_3 = arith.constant 0 : index
    %11 = vector.load %arg3[%c0_2, %c0_3] : memref<32x16xf32, #tpu.memory_space<vmem>>, vector<32x16xf32>
    %cst_4 = arith.constant dense<0.000000e+00> : vector<8x16xf32>
    %12 = tpu.matmul %10, %11, %cst_4 {dimension_numbers = #tpu.dot_dimension_numbers<[1], [0], [0], [1], [0, 0, 1, 1], [], []>} : vector<8x32xf32>, vector<32x16xf32>, vector<8x16xf32> -> vector<8x16xf32>
    %c0_5 = arith.constant 0 : index
    %c0_6 = arith.constant 0 : index
    %13 = vector.load %arg4[%c0_5, %c0_6] : memref<8x16xf32, #tpu.memory_space<vmem>>, vector<8x16xf32>
    tpu.vector_store %arg4[%c0_5, %c0_6], %12 {strides = array<i32>} : memref<8x16xf32, #tpu.memory_space<vmem>>, vector<8x16xf32>,
    return
  }
  func.func @transform_0(%arg0: i32, %arg1: i32) -> (i32, i32) {
    %c0_i32 = arith.constant 0 : i32
    %c0_i32_0 = arith.constant 0 : i32
    return %arg0, %c0_i32 : i32, i32
  }
  func.func @transform_1(%arg0: i32, %arg1: i32) -> (i32, i32) {
    %c0_i32 = arith.constant 0 : i32
    %c0_i32_0 = arith.constant 0 : i32
    return %c0_i32, %arg1 : i32, i32
  }
  func.func @transform_2(%arg0: i32, %arg1: i32) -> (i32, i32) {
    %c0_i32 = arith.constant 0 : i32
    return %arg0, %arg1 : i32, i32
  }
}

module attributes {stable_mosaic.version = 11 : i64} {
  func.func @attn_kernel(%arg0: i32, %arg1: i32, %arg2: memref<8x32xf32, #tpu.memory_space<vmem>>, %arg3: memref<32x16xf32, #tpu.memory_space<vmem>>, %arg4: memref<8x16xf32, #tpu.memory_space<vmem>>) attributes {dimension_semantics = [#tpu.dimension_semantics<parallel>, #tpu.dimension_semantics<parallel>], iteration_bounds = array<i64: 1, 1>, scalar_prefetch = 0 : i64, scratch_operands = 0 : i64, tpu.core_type = #tpu.core_type<tc>, window_params = [{transform_indices = @transform_0, window_bounds = array<i64: 8, 32>}, {transform_indices = @transform_1, window_bounds = array<i64: 32, 16>}, {transform_indices = @transform_2, window_bounds = array<i64: 8, 16>}]} {
    %c0 = arith.constant 0 : index
    %c0_0 = arith.constant 0 : index
    %0 = vector.load %arg2[%c0, %c0_0] : memref<8x32xf32, #tpu.memory_space<vmem>>, vector<8x32xf32>
    %cst = arith.constant dense<0xFF800000> : vector<8xf32>
    %1 = vector.multi_reduction <maximumf>, %0, %cst [1] : vector<8x32xf32> to vector<8xf32>
    %2 = vector.shape_cast %1 : vector<8xf32> to vector<8x1xf32>
    %3 = vector.broadcast %2 : vector<8x1xf32> to vector<8x32xf32>
    %4 = arith.subf %0, %3 : vector<8x32xf32>
    %5 = math.exp %4 : vector<8x32xf32>
    %cst_1 = arith.constant dense<0.000000e+00> : vector<8xf32>
    %6 = vector.multi_reduction <add>, %5, %cst_1 [1] : vector<8x32xf32> to vector<8xf32>
    %7 = vector.shape_cast %6 : vector<8xf32> to vector<8x1xf32>
    %8 = vector.broadcast %7 : vector<8x1xf32> to vector<8x32xf32>
    %9 = arith.divf %5, %8 : vector<8x32xf32>
    %10 = arith.mulf %9, %0 : vector<8x32xf32>
    %c0_2 = arith.constant 0 : index
    %c0_3 = arith.constant 0 : index
    %11 = vector.load %arg3[%c0_2, %c0_3] : memref<32x16xf32, #tpu.memory_space<vmem>>, vector<32x16xf32>
    %cst_4 = arith.constant dense<0.000000e+00> : vector<8x16xf32>
    %12 = tpu.matmul %10, %11, %cst_4 {dimension_numbers = #tpu.dot_dimension_numbers<[1], [0], [0], [1], [0, 0, 1, 1], [], []>} : vector<8x32xf32>, vector<32x16xf32>, vector<8x16xf32> -> vector<8x16xf32>
    %c0_5 = arith.constant 0 : index
    %c0_6 = arith.constant 0 : index
    %13 = vector.load %arg4[%c0_5, %c0_6] : memref<8x16xf32, #tpu.memory_space<vmem>>, vector<8x16xf32>
    tpu.vector_store %arg4[%c0_5, %c0_6], %12 {strides = array<i32>} : memref<8x16xf32, #tpu.memory_space<vmem>>, vector<8x16xf32>,
    return
  }
  func.func @transform_0(%arg0: i32, %arg1: i32) -> (i32, i32) {
    %c0_i32 = arith.constant 0 : i32
    %c0_i32_0 = arith.constant 0 : i32
    return %arg0, %c0_i32 : i32, i32
  }
  func.func @transform_1(%arg0: i32, %arg1: i32) -> (i32, i32) {
    %c0_i32 = arith.constant 0 : i32
    %c0_i32_0 = arith.constant 0 : i32
    return %c0_i32, %arg1 : i32, i32
  }
  func.func @transform_2(%arg0: i32, %arg1: i32) -> (i32, i32) {
    %c0_i32 = arith.constant 0 : i32
    return %arg0, %arg1 : i32, i32
  }
}

</mosaic_0001>

<llo_original>
// kernel: tpu_custom_call.1
$region0: #{tpu_custom_call.1}
  #allocation0 [shape = 'u32[]', space=smem, size = 0x4, offset = 0x4, fixed_abs, tag = 'smem constant byte address 0x4 - core index']
  #allocation1 [shape = 'u32[144,128]{1,0:T(1,128)}', space=vmem, size = 0x12000, scoped, tag = 'internal scratch']
  %s0 = inlined_call_operand.vmem [shape: f32[8,32], index: 0, kind: input, shape index: {}]
  %s1 = inlined_call_operand.vmem [shape: f32[32,16], index: 1, kind: input, shape index: {}]
  %s2 = inlined_call_operand.hbm [shape: f32[8,16], index: 2, kind: output, shape index: {}]
  %s3 = sld [smem:[#allocation0]]
  $region18: #{tpu_custom_call.1} parent=0
    _
  %s5 = ssub.s32 1, %s3
  %s6 = scalar_select 0, %s5, %s3
  $region1: #{tpu_custom_call.1} parent=0
    #allocation2 [shape = 'u8[4096]{0}', space=vmem, size = 0x1000, scoped, tag = 'output window, operand 0, single buffered']
    #allocation3 [shape = 's32[1]{0}', space=sflag, size = 0x4, scoped, tag = 'scoped memory for tpu_custom_call.1']
    %7 = vsyncpa [#allocation3], 0
    // Predicated region
    $region2: #{tpu_custom_call.1} parent=1 // pred_check
      _
    $region3: #{tpu_custom_call.1} parent=1 // pred_check_branch
      %9 = sbr.rel (0) target = $region5
    $region4: #{tpu_custom_call.1} parent=1 // pred_region
      _
    $region5: #{tpu_custom_call.1} parent=1 // pred_fallthru
      _
    // Predicated region
    $region6: #{tpu_custom_call.1} parent=1 // pred_check
      _
    $region7: #{tpu_custom_call.1} parent=1 // pred_check_branch
      %11 = sbr.rel (0) target = $region9
    $region8: #{tpu_custom_call.1} parent=1 // pred_region
      _
    $region9: #{tpu_custom_call.1} parent=1 // pred_fallthru
      _
    %v12 = vld [vmem:[%s0] sm:$0xff]
    %vm13 = vcmask 261120
    %v14 = vsel %vm13, %v12, -inf
    %15 = vmax.xlane.f32.xlu0 %v14
    %v16 = vpop.xlane.xlu0 %15
    %v17 = vsub.f32 %v12, %v16
    %v18 = vmul.f32 %v17, 1.442695
    %v19 = vpow.pop %v18
    %v20 = vsel %vm13, %v19, 0.0
    %21 = vadd.xlane.f32.xlu0 %v20
    %v22 = vpop.xlane.xlu0 %21
    %v23 = vrcp.pop %v22
    %v24 = vmul.f32 %v19, %v23
    %v25 = vmul.f32 %v24, %v12
    %v26 = vld [vmem:[%s1] sm:$0xff]
    %v27 = vld [vmem:[%s1 + $0x8] sm:$0xff]
    %v28 = vld [vmem:[%s1 + $0x10] sm:$0xff]
    %v29 = vld [vmem:[%s1 + $0x18] sm:$0xff]
    %v31 = vsel %vm13, %v25, 0
    %33 = vmatprep.subr.mxu0 0.0
    %34 = vmatpush1.msra.mxu0 0.0
    %35 = vmatprep.subr.mxu0 0.0
    %36 = vmatpush1.msra.mxu0 0.0
    %37 = vmatprep.subr.mxu0 0.0
    %38 = vmatpush1.msra.mxu0 0.0
    %39 = vmatprep.subr.mxu0 0.0
    %40 = vmatpush1.msra.mxu0 0.0
    %41 = vmatprep.subr.mxu0 0.0
    %42 = vmatpush1.msra.mxu0 0.0
    %43 = vmatprep.subr.mxu0 0.0
    %44 = vmatpush1.msra.mxu0 0.0
    %45 = vmatprep.subr.mxu0 0.0
    %46 = vmatpush1.msra.mxu0 0.0
    %47 = vmatprep.subr.mxu0 0.0
    %48 = vmatpush1.msra.mxu0 0.0
    %49 = vmatprep.subr.mxu0 0.0
    %50 = vmatpush1.msra.mxu0 0.0
    %51 = vmatprep.subr.mxu0 0.0
    %52 = vmatpush1.msra.mxu0 0.0
    %53 = vmatprep.subr.mxu0 0.0
    %54 = vmatpush1.msra.mxu0 0.0
    %55 = vmatprep.subr.mxu0 0.0
    %56 = vmatpush1.msra.mxu0 0.0
    %57 = vmatprep.subr.mxu0 0.0
    %58 = vmatpush1.msra.mxu0 %v29
    %59 = vmatprep.subr.mxu0 0.0
    %60 = vmatpush1.msra.mxu0 %v28
    %61 = vmatprep.subr.mxu0 0.0
    %62 = vmatpush1.msra.mxu0 %v27
    %63 = vmatprep.subr.mxu0 0.0
    %64 = vmatpush1.msra.mxu0 %v26
    %65 = vmatprep.subr.mxu0 0.0
    %66 = vmatpush2.msra.mxu0 0.0
    %67 = vmatprep.subr.mxu0 0.0
    %68 = vmatpush2.msra.mxu0 0.0
    %69 = vmatprep.subr.mxu0 0.0
    %70 = vmatpush2.msra.mxu0 0.0
    %71 = vmatprep.subr.mxu0 0.0
    %72 = vmatpush2.msra.mxu0 0.0
    %73 = vmatprep.subr.mxu0 0.0
    %74 = vmatpush2.msra.mxu0 0.0
    %75 = vmatprep.subr.mxu0 0.0
    %76 = vmatpush2.msra.mxu0 0.0
    %77 = vmatprep.subr.mxu0 0.0
    %78 = vmatpush2.msra.mxu0 0.0
    %79 = vmatprep.subr.mxu0 0.0
    %80 = vmatpush2.msra.mxu0 0.0
    %81 = vmatprep.subr.mxu0 0.0
    %82 = vmatpush2.msra.mxu0 0.0
    %83 = vmatprep.subr.mxu0 0.0
    %84 = vmatpush2.msra.mxu0 0.0
    %85 = vmatprep.subr.mxu0 0.0
    %86 = vmatpush2.msra.mxu0 0.0
    %87 = vmatprep.subr.mxu0 0.0
    %88 = vmatpush2.msra.mxu0 0.0
    %89 = vmatprep.subr.mxu0 0.0
    %90 = vmatpush2.msra.mxu0 0.0
    %91 = vmatprep.subr.mxu0 0.0
    %92 = vmatpush2.msra.mxu0 0.0
    %93 = vmatprep.subr.mxu0 0.0
    %94 = vmatpush2.msra.mxu0 0.0
    %95 = vmatprep.subr.mxu0 0.0
    %96 = vmatpush2.msra.mxu0 0.0
    %97 = vmatprep.mubr.f32.mxu0 0.0
    %98 = vmatmul.mubr.f32.gmra.mxu0 %v31
    %v99 = vpop.f32.mrf.mxu0
    %v100 = vadd.f32 0.0, %v99
    %v101 = vpop.f32.mrf.mxu0
    %102 = vdwg.mxu0
    %vm103 = vcmask 130048
    %104 = vst.msk [vmem:[#allocation2] sm:$0xff] %vm103, %v100
    // Predicated region
    $region10: #{tpu_custom_call.1} parent=1 // pred_check
      _
    $region11: #{tpu_custom_call.1} parent=1 // pred_check_branch
      %106 = sbr.rel (0) target = $region13
    $region12: #{tpu_custom_call.1} parent=1 // pred_region
      %s108 = ssub.s32 128, 128
      %109 = vsyncadd [#allocation3], %s108
      %s111 = sshll.u32 [#allocation2], 4
      %s112 = int_to_ptr.vmem [resolvable:$true] %s111
      %114 = dma.vmem_to_hbm [thread:$0]  %s112, 128, %s2, [#allocation3]
    $region13: #{tpu_custom_call.1} parent=1 // pred_fallthru
      _
    // Predicated region
    $region14: #{tpu_custom_call.1} parent=1 // pred_check
      _
    $region15: #{tpu_custom_call.1} parent=1 // pred_check_branch
      %116 = sbr.rel (0) target = $region17
    $region16: #{tpu_custom_call.1} parent=1 // pred_region
      %117 = dma.done [#allocation3], 128
    $region17: #{tpu_custom_call.1} parent=1 // pred_fallthru
      _
    %118 = vsyncpa [#allocation3], 1

// kernel: tpu_custom_call.1
$region0: #{tpu_custom_call.1}
  #allocation0 [shape = 'u32[]', space=smem, size = 0x4, offset = 0x4, fixed_abs, tag = 'smem constant byte address 0x4 - core index']
  #allocation1 [shape = 'u32[144,128]{1,0:T(1,128)}', space=vmem, size = 0x12000, scoped, tag = 'internal scratch']
  %s0 = inlined_call_operand.vmem [shape: f32[8,32], index: 0, kind: input, shape index: {}]
  %s1 = inlined_call_operand.vmem [shape: f32[32,16], index: 1, kind: input, shape index: {}]
  %s2 = inlined_call_operand.hbm [shape: f32[8,16], index: 2, kind: output, shape index: {}]
  %s3 = sld [smem:[#allocation0]]
  $region18: #{tpu_custom_call.1} parent=0
    _
  %s5 = ssub.s32 1, %s3
  %s6 = scalar_select 0, %s5, %s3
  $region1: #{tpu_custom_call.1} parent=0
    #allocation2 [shape = 'u8[4096]{0}', space=vmem, size = 0x1000, scoped, tag = 'output window, operand 0, single buffered']
    #allocation3 [shape = 's32[1]{0}', space=sflag, size = 0x4, scoped, tag = 'scoped memory for tpu_custom_call.1']
    %7 = vsyncpa [#allocation3], 0
    // Predicated region
    $region2: #{tpu_custom_call.1} parent=1 // pred_check
      _
    $region3: #{tpu_custom_call.1} parent=1 // pred_check_branch
      %9 = sbr.rel (0) target = $region5
    $region4: #{tpu_custom_call.1} parent=1 // pred_region
      _
    $region5: #{tpu_custom_call.1} parent=1 // pred_fallthru
      _
    // Predicated region
    $region6: #{tpu_custom_call.1} parent=1 // pred_check
      _
    $region7: #{tpu_custom_call.1} parent=1 // pred_check_branch
      %11 = sbr.rel (0) target = $region9
    $region8: #{tpu_custom_call.1} parent=1 // pred_region
      _
    $region9: #{tpu_custom_call.1} parent=1 // pred_fallthru
      _
    %v12 = vld [vmem:[%s0] sm:$0xff]
    %vm13 = vcmask 261120
    %v14 = vsel %vm13, %v12, -inf
    %15 = vmax.xlane.f32.xlu0 %v14
    %v16 = vpop.xlane.xlu0 %15
    %v17 = vsub.f32 %v12, %v16
    %v18 = vmul.f32 %v17, 1.442695
    %v19 = vpow.pop %v18
    %v20 = vsel %vm13, %v19, 0.0
    %21 = vadd.xlane.f32.xlu0 %v20
    %v22 = vpop.xlane.xlu0 %21
    %v23 = vrcp.pop %v22
    %v24 = vmul.f32 %v19, %v23
    %v25 = vmul.f32 %v24, %v12
    %v26 = vld [vmem:[%s1] sm:$0xff]
    %v27 = vld [vmem:[%s1 + $0x8] sm:$0xff]
    %v28 = vld [vmem:[%s1 + $0x10] sm:$0xff]
    %v29 = vld [vmem:[%s1 + $0x18] sm:$0xff]
    %v31 = vsel %vm13, %v25, 0
    %33 = vmatprep.subr.mxu0 0.0
    %34 = vmatpush1.msra.mxu0 0.0
    %35 = vmatprep.subr.mxu0 0.0
    %36 = vmatpush1.msra.mxu0 0.0
    %37 = vmatprep.subr.mxu0 0.0
    %38 = vmatpush1.msra.mxu0 0.0
    %39 = vmatprep.subr.mxu0 0.0
    %40 = vmatpush1.msra.mxu0 0.0
    %41 = vmatprep.subr.mxu0 0.0
    %42 = vmatpush1.msra.mxu0 0.0
    %43 = vmatprep.subr.mxu0 0.0
    %44 = vmatpush1.msra.mxu0 0.0
    %45 = vmatprep.subr.mxu0 0.0
    %46 = vmatpush1.msra.mxu0 0.0
    %47 = vmatprep.subr.mxu0 0.0
    %48 = vmatpush1.msra.mxu0 0.0
    %49 = vmatprep.subr.mxu0 0.0
    %50 = vmatpush1.msra.mxu0 0.0
    %51 = vmatprep.subr.mxu0 0.0
    %52 = vmatpush1.msra.mxu0 0.0
    %53 = vmatprep.subr.mxu0 0.0
    %54 = vmatpush1.msra.mxu0 0.0
    %55 = vmatprep.subr.mxu0 0.0
    %56 = vmatpush1.msra.mxu0 0.0
    %57 = vmatprep.subr.mxu0 0.0
    %58 = vmatpush1.msra.mxu0 %v29
    %59 = vmatprep.subr.mxu0 0.0
    %60 = vmatpush1.msra.mxu0 %v28
    %61 = vmatprep.subr.mxu0 0.0
    %62 = vmatpush1.msra.mxu0 %v27
    %63 = vmatprep.subr.mxu0 0.0
    %64 = vmatpush1.msra.mxu0 %v26
    %65 = vmatprep.subr.mxu0 0.0
    %66 = vmatpush2.msra.mxu0 0.0
    %67 = vmatprep.subr.mxu0 0.0
    %68 = vmatpush2.msra.mxu0 0.0
    %69 = vmatprep.subr.mxu0 0.0
    %70 = vmatpush2.msra.mxu0 0.0
    %71 = vmatprep.subr.mxu0 0.0
    %72 = vmatpush2.msra.mxu0 0.0
    %73 = vmatprep.subr.mxu0 0.0
    %74 = vmatpush2.msra.mxu0 0.0
    %75 = vmatprep.subr.mxu0 0.0
    %76 = vmatpush2.msra.mxu0 0.0
    %77 = vmatprep.subr.mxu0 0.0
    %78 = vmatpush2.msra.mxu0 0.0
    %79 = vmatprep.subr.mxu0 0.0
    %80 = vmatpush2.msra.mxu0 0.0
    %81 = vmatprep.subr.mxu0 0.0
    %82 = vmatpush2.msra.mxu0 0.0
    %83 = vmatprep.subr.mxu0 0.0
    %84 = vmatpush2.msra.mxu0 0.0
    %85 = vmatprep.subr.mxu0 0.0
    %86 = vmatpush2.msra.mxu0 0.0
    %87 = vmatprep.subr.mxu0 0.0
    %88 = vmatpush2.msra.mxu0 0.0
    %89 = vmatprep.subr.mxu0 0.0
    %90 = vmatpush2.msra.mxu0 0.0
    %91 = vmatprep.subr.mxu0 0.0
    %92 = vmatpush2.msra.mxu0 0.0
    %93 = vmatprep.subr.mxu0 0.0
    %94 = vmatpush2.msra.mxu0 0.0
    %95 = vmatprep.subr.mxu0 0.0
    %96 = vmatpush2.msra.mxu0 0.0
    %97 = vmatprep.mubr.f32.mxu0 0.0
    %98 = vmatmul.mubr.f32.gmra.mxu0 %v31
    %v99 = vpop.f32.mrf.mxu0
    %v100 = vadd.f32 0.0, %v99
    %v101 = vpop.f32.mrf.mxu0
    %102 = vdwg.mxu0
    %vm103 = vcmask 130048
    %104 = vst.msk [vmem:[#allocation2] sm:$0xff] %vm103, %v100
    // Predicated region
    $region10: #{tpu_custom_call.1} parent=1 // pred_check
      _
    $region11: #{tpu_custom_call.1} parent=1 // pred_check_branch
      %106 = sbr.rel (0) target = $region13
    $region12: #{tpu_custom_call.1} parent=1 // pred_region
      %s108 = ssub.s32 128, 128
      %109 = vsyncadd [#allocation3], %s108
      %s111 = sshll.u32 [#allocation2], 4
      %s112 = int_to_ptr.vmem [resolvable:$true] %s111
      %114 = dma.vmem_to_hbm [thread:$0]  %s112, 128, %s2, [#allocation3]
    $region13: #{tpu_custom_call.1} parent=1 // pred_fallthru
      _
    // Predicated region
    $region14: #{tpu_custom_call.1} parent=1 // pred_check
      _
    $region15: #{tpu_custom_call.1} parent=1 // pred_check_branch
      %116 = sbr.rel (0) target = $region17
    $region16: #{tpu_custom_call.1} parent=1 // pred_region
      %117 = dma.done [#allocation3], 128
    $region17: #{tpu_custom_call.1} parent=1 // pred_fallthru
      _
    %118 = vsyncpa [#allocation3], 1

</llo_original>
